<compile_context>
chip_gen: v6e
topology: v6e:2x2x1
jax: 0.10.0
libtpu: 0.0.40
codegen_flags: <defaults>
</compile_context>

<pallas_src>
import jax
import jax.numpy as jnp
from jax.experimental import pallas as pl
from jax.experimental.pallas import tpu as pltpu

D_IN = 512
D_OUT = 512


def _round_up(a: int, b: int) -> int:
    return (a + b - 1) // b * b


def linear_kernel(x_ref, w_t_ref, b_ref, o_ref):
    # x_ref: (TM, D_IN) bf16, w_t_ref: (D_IN, D_OUT) bf16, b_ref: (1, D_OUT) f32
    acc = jnp.dot(x_ref[...], w_t_ref[...], preferred_element_type=jnp.float32)
    o_ref[...] = (acc + b_ref[...]).astype(o_ref.dtype)


def pallas_linear(x, weight, bias, *, block_m: int = 1024, out_dtype=None):
    """y = x @ weight.T + bias, for x of shape (..., 512)."""
    *lead, d_in = x.shape
    assert d_in == D_IN and weight.shape == (D_OUT, D_IN) and bias.shape == (D_OUT,)
    if out_dtype is None:
        out_dtype = x.dtype

    # Fold all leading dims into M (contiguous reshape, no transpose), feed the
    # MXU bf16 activations.  If upstream already produces bf16, no cast at all.
    x2 = x.reshape(-1, d_in)
    if x2.dtype != jnp.bfloat16:
        x2 = x2.astype(jnp.bfloat16)
    m = x2.shape[0]

    # bf16 packs 16 sublanes per vreg -> round the M tile to 16.
    tm = min(block_m, _round_up(m, 16))
    grid_m = pl.cdiv(m, tm)  # ragged last block is masked by Pallas; no pad copy

    w_t = weight.T.astype(jnp.bfloat16)            # (D_IN, D_OUT), VMEM-resident
    b = bias.reshape(1, D_OUT).astype(jnp.float32)

    # TODO(synk): for repeated tiny-M (decode-like) calls, stage w_t in VMEM
    # across calls / batch token blocks so the 512 KiB weight DMA is amortized.
    out = pl.pallas_call(
        linear_kernel,
        out_shape=jax.ShapeDtypeStruct((m, D_OUT), out_dtype),
        grid=(grid_m,),
        in_specs=[
            pl.BlockSpec((tm, D_IN), lambda i: (i, 0)),
            pl.BlockSpec((D_IN, D_OUT), lambda i: (0, 0)),   # grid-invariant weight
            pl.BlockSpec((1, D_OUT), lambda i: (0, 0)),      # grid-invariant bias
        ],
        out_specs=pl.BlockSpec((tm, D_OUT), lambda i: (i, 0)),
        compiler_params=pltpu.CompilerParams(
            dimension_semantics=("parallel",)),
    )(x2, w_t, b)

    return out.reshape(*lead, D_OUT)


def _reference(x, weight, bias):
    return jnp.einsum("...i,oi->...o", x, weight) + bias


if __name__ == "__main__":
    key = jax.random.PRNGKey(0)
    k_x, k_w, k_b = jax.random.split(key, 3)

    # Small shapes consistent with the module: sequence-first (L=8, B=2, D=512).
    L, B = 8, 2
    x = jax.random.normal(k_x, (L, B, D_IN), jnp.float32)
    weight = 0.02 * jax.random.normal(k_w, (D_OUT, D_IN), jnp.float32)
    bias = 0.02 * jax.random.normal(k_b, (D_OUT,), jnp.float32)

    out = pallas_linear(x, weight, bias)
    out = jax.block_until_ready(out)

    ref = _reference(x, weight, bias)
    assert out.shape == (L, B, D_OUT)
    assert out.dtype == jnp.float32
    # bf16 matmul operands with f32 accumulation -> loosened tolerance vs f32 ref.
    assert jnp.allclose(out, ref, atol=2e-2, rtol=2e-2), float(
        jnp.max(jnp.abs(out - ref)))

    # Also exercise a ragged-M case (M=3*2=6 not a multiple of 16) to confirm
    # the masked partial block path is correct without pad/slice copies.
    x_r = jax.random.normal(k_x, (3, 2, D_IN), jnp.float32)
    out_r = jax.block_until_ready(pallas_linear(x_r, weight, bias))
    ref_r = _reference(x_r, weight, bias)
    assert jnp.allclose(out_r, ref_r, atol=2e-2, rtol=2e-2), float(
        jnp.max(jnp.abs(out_r - ref_r)))

    print("KERNEL_OK")
</pallas_src>

<mosaic_0001>
module attributes {stable_mosaic.version = 11 : i64} {
  func.func @linear_kernel(%arg0: i32, %arg1: memref<16x512xbf16, #tpu.memory_space<vmem>>, %arg2: memref<512x512xbf16, #tpu.memory_space<vmem>>, %arg3: memref<1x512xf32, #tpu.memory_space<vmem>>, %arg4: memref<16x512xf32, #tpu.memory_space<vmem>>) attributes {dimension_semantics = [#tpu.dimension_semantics<parallel>], iteration_bounds = array<i64: 1>, scalar_prefetch = 0 : i64, scratch_operands = 0 : i64, tpu.core_type = #tpu.core_type<tc>, window_params = [{transform_indices = @transform_0, window_bounds = array<i64: 16, 512>}, {pipeline_mode = #tpu.pipeline_mode<synchronous>, transform_indices = @transform_1, window_bounds = array<i64: 512, 512>}, {pipeline_mode = #tpu.pipeline_mode<synchronous>, transform_indices = @transform_2, window_bounds = array<i64: 1, 512>}, {transform_indices = @transform_3, window_bounds = array<i64: 16, 512>}]} {
    %c0 = arith.constant 0 : index
    %c0_0 = arith.constant 0 : index
    %0 = vector.load %arg1[%c0, %c0_0] : memref<16x512xbf16, #tpu.memory_space<vmem>>, vector<16x512xbf16>
    %c0_1 = arith.constant 0 : index
    %c0_2 = arith.constant 0 : index
    %1 = vector.load %arg2[%c0_1, %c0_2] : memref<512x512xbf16, #tpu.memory_space<vmem>>, vector<512x512xbf16>
    %cst = arith.constant dense<0.000000e+00> : vector<16x512xf32>
    %2 = tpu.matmul %0, %1, %cst {dimension_numbers = #tpu.dot_dimension_numbers<[1], [0], [0], [1], [0, 0, 1, 1], [], []>} : vector<16x512xbf16>, vector<512x512xbf16>, vector<16x512xf32> -> vector<16x512xf32>
    %c0_3 = arith.constant 0 : index
    %c0_4 = arith.constant 0 : index
    %3 = vector.load %arg3[%c0_3, %c0_4] : memref<1x512xf32, #tpu.memory_space<vmem>>, vector<1x512xf32>
    %4 = vector.broadcast %3 : vector<1x512xf32> to vector<16x512xf32>
    %5 = arith.addf %2, %4 : vector<16x512xf32>
    %c0_5 = arith.constant 0 : index
    %c0_6 = arith.constant 0 : index
    %6 = vector.load %arg4[%c0_5, %c0_6] : memref<16x512xf32, #tpu.memory_space<vmem>>, vector<16x512xf32>
    tpu.vector_store %arg4[%c0_5, %c0_6], %5 {strides = array<i32>} : memref<16x512xf32, #tpu.memory_space<vmem>>, vector<16x512xf32>,
    return
  }
  func.func @transform_0(%arg0: i32) -> (i32, i32) {
    %c0_i32 = arith.constant 0 : i32
    %c0_i32_0 = arith.constant 0 : i32
    return %arg0, %c0_i32 : i32, i32
  }
  func.func @transform_1(%arg0: i32) -> (i32, i32) {
    %c0_i32 = arith.constant 0 : i32
    %c0_i32_0 = arith.constant 0 : i32
    %c0_i32_1 = arith.constant 0 : i32
    return %c0_i32, %c0_i32_0 : i32, i32
  }
  func.func @transform_2(%arg0: i32) -> (i32, i32) {
    %c0_i32 = arith.constant 0 : i32
    %c0_i32_0 = arith.constant 0 : i32
    %c0_i32_1 = arith.constant 0 : i32
    return %c0_i32, %c0_i32_0 : i32, i32
  }
  func.func @transform_3(%arg0: i32) -> (i32, i32) {
    %c0_i32 = arith.constant 0 : i32
    %c0_i32_0 = arith.constant 0 : i32
    return %arg0, %c0_i32 : i32, i32
  }
}

</mosaic_0001>

<llo_original>
// kernel: tpu_custom_call.1
$region0: #{tpu_custom_call.1}
  #allocation0 [shape = 'u32[]', space=smem, size = 0x4, offset = 0x4, fixed_abs, tag = 'smem constant byte address 0x4 - core index']
  #allocation1 [shape = 'u32[144,128]{1,0:T(1,128)}', space=vmem, size = 0x12000, scoped, tag = 'internal scratch']
  %s0 = inlined_call_operand.hbm [shape: bf16[16,512], index: 0, kind: input, shape index: {}]
  %s1 = inlined_call_operand.hbm [shape: bf16[512,512], index: 1, kind: input, shape index: {}]
  %s2 = inlined_call_operand.hbm [shape: f32[1,512], index: 2, kind: input, shape index: {}]
  %s3 = inlined_call_operand.hbm [shape: f32[16,512], index: 3, kind: output, shape index: {}]
  %s4 = sld [smem:[#allocation0]]
  $region34: #{tpu_custom_call.1} parent=0
    _
  %s6 = ssub.s32 1, %s4
  %s7 = scalar_select 0, %s6, %s4
  $region1: #{tpu_custom_call.1} parent=0
    #allocation2 [shape = 'u8[16384]{0}', space=vmem, size = 0x4000, scoped, tag = 'input window, operand 0, single buffered']
    #allocation3 [shape = 's32[1]{0}', space=sflag, size = 0x4, scoped, tag = 'scoped memory for tpu_custom_call.1']
    #allocation4 [shape = 's32[1]{0}', space=sflag, size = 0x4, scoped, tag = 'scoped memory for tpu_custom_call.1']
    #allocation5 [shape = 'u8[524288]{0}', space=vmem, size = 0x80000, scoped, tag = 'input window, operand 1, single buffered']
    #allocation6 [shape = 's32[1]{0}', space=sflag, size = 0x4, scoped, tag = 'scoped memory for tpu_custom_call.1']
    #allocation7 [shape = 'u8[2048]{0}', space=vmem, size = 0x800, scoped, tag = 'input window, operand 2, single buffered']
    #allocation8 [shape = 'u8[32768]{0}', space=vmem, size = 0x8000, scoped, tag = 'output window, operand 0, single buffered']
    %8 = vsyncpa [#allocation3], 0
    %9 = vsyncpa [#allocation6], 0
    %10 = vsyncpa [#allocation4], 0
    // Predicated region
    $region2: #{tpu_custom_call.1} parent=1 // pred_check
      _
    $region3: #{tpu_custom_call.1} parent=1 // pred_check_branch
      %12 = sbr.rel (0) target = $region5
    $region4: #{tpu_custom_call.1} parent=1 // pred_region
      %s14 = ssub.s32 512, 512
      %15 = vsyncadd [#allocation3], %s14
      %s16 = sshll.u32 [#allocation2], 4
      %s17 = int_to_ptr.vmem [resolvable:$true] %s16
      %22 = dma.hbm_to_vmem [thread:$0]  %s0, 512, %s17, [#allocation3], 256, 256, 16
    $region5: #{tpu_custom_call.1} parent=1 // pred_fallthru
      _
    // Predicated region
    $region6: #{tpu_custom_call.1} parent=1 // pred_check
      _
    $region7: #{tpu_custom_call.1} parent=1 // pred_check_branch
      %24 = sbr.rel (0) target = $region9
    $region8: #{tpu_custom_call.1} parent=1 // pred_region
      %s26 = ssub.s32 16384, 16384
      %27 = vsyncadd [#allocation6], %s26
      %s28 = sshll.u32 [#allocation5], 4
      %s29 = int_to_ptr.vmem [resolvable:$true] %s28
      %34 = dma.hbm_to_vmem [thread:$0]  %s1, 16384, %s29, [#allocation6], 256, 256, 16
    $region9: #{tpu_custom_call.1} parent=1 // pred_fallthru
      _
    // Predicated region
    $region10: #{tpu_custom_call.1} parent=1 // pred_check
      _
    $region11: #{tpu_custom_call.1} parent=1 // pred_check_branch
      %36 = sbr.rel (0) target = $region13
    $region12: #{tpu_custom_call.1} parent=1 // pred_region
      %s38 = ssub.s32 64, 64
      %39 = vsyncadd [#allocation6], %s38
      %s41 = sshll.u32 [#allocation7], 4
      %s42 = int_to_ptr.vmem [resolvable:$true] %s41
      %44 = dma.hbm_to_vmem [thread:$0]  %s2, 64, %s42, [#allocation6]
    $region13: #{tpu_custom_call.1} parent=1 // pred_fallthru
      _
    // Predicated region
    $region14: #{tpu_custom_call.1} parent=1 // pred_check
      _
    $region15: #{tpu_custom_call.1} parent=1 // pred_check_branch
      %46 = sbr.rel (0) target = $region17
    $region16: #{tpu_custom_call.1} parent=1 // pred_region
      %47 = dma.done [#allocation3], 512
    $region17: #{tpu_custom_call.1} parent=1 // pred_fallthru
      _
    // Predicated region
    $region18: #{tpu_custom_call.1} parent=1 // pred_check
      _
    $region19: #{tpu_custom_call.1} parent=1 // pred_check_branch
      %49 = sbr.rel (0) target = $region21
    $region20: #{tpu_custom_call.1} parent=1 // pred_region
      %50 = dma.done [#allocation6], 16384
    $region21: #{tpu_custom_call.1} parent=1 // pred_fallthru
      _
    // Predicated region
    $region22: #{tpu_custom_call.1} parent=1 // pred_check
      _
    $region23: #{tpu_custom_call.1} parent=1 // pred_check_branch
      %52 = sbr.rel (0) target = $region25
    $region24: #{tpu_custom_call.1} parent=1 // pred_region
      %53 = dma.done [#allocation6], 64
    $region25: #{tpu_custom_call.1} parent=1 // pred_fallthru
      _
    %v54 = vld [vmem:[#allocation2] sm:$0xff]
    %v55 = vld [vmem:[#allocation2 + $0x8] sm:$0xff]
    %v56 = vld [vmem:[#allocation2 + $0x10] sm:$0xff]
    %v57 = vld [vmem:[#allocation2 + $0x18] sm:$0xff]
    %v58 = vld [vmem:[#allocation5] sm:$0xff]
    %v59 = vld [vmem:[#allocation5 + $0x8] sm:$0xff]
    %v60 = vld [vmem:[#allocation5 + $0x10] sm:$0xff]
    %v61 = vld [vmem:[#allocation5 + $0x18] sm:$0xff]
    %v62 = vld [vmem:[#allocation5 + $0x20] sm:$0xff]
    %v63 = vld [vmem:[#allocation5 + $0x28] sm:$0xff]
    %v64 = vld [vmem:[#allocation5 + $0x30] sm:$0xff]
    %v65 = vld [vmem:[#allocation5 + $0x38] sm:$0xff]
    %v66 = vld [vmem:[#allocation5 + $0x40] sm:$0xff]
    %v67 = vld [vmem:[#allocation5 + $0x48] sm:$0xff]
    %v68 = vld [vmem:[#allocation5 + $0x50] sm:$0xff]
    %v69 = vld [vmem:[#allocation5 + $0x58] sm:$0xff]
    %v70 = vld [vmem:[#allocation5 + $0x60] sm:$0xff]
    %v71 = vld [vmem:[#allocation5 + $0x68] sm:$0xff]
    %v72 = vld [vmem:[#allocation5 + $0x70] sm:$0xff]
    %v73 = vld [vmem:[#allocation5 + $0x78] sm:$0xff]
    %v74 = vld [vmem:[#allocation5 + $0x80] sm:$0xff]
    %v75 = vld [vmem:[#allocation5 + $0x88] sm:$0xff]
    %v76 = vld [vmem:[#allocation5 + $0x90] sm:$0xff]
    %v77 = vld [vmem:[#allocation5 + $0x98] sm:$0xff]
    %v78 = vld [vmem:[#allocation5 + $0xa0] sm:$0xff]
    %v79 = vld [vmem:[#allocation5 + $0xa8] sm:$0xff]
    %v80 = vld [vmem:[#allocation5 + $0xb0] sm:$0xff]
    %v81 = vld [vmem:[#allocation5 + $0xb8] sm:$0xff]
    %v82 = vld [vmem:[#allocation5 + $0xc0] sm:$0xff]
    %v83 = vld [vmem:[#allocation5 + $0xc8] sm:$0xff]
    %v84 = vld [vmem:[#allocation5 + $0xd0] sm:$0xff]
    %v85 = vld [vmem:[#allocation5 + $0xd8] sm:$0xff]
    %v86 = vld [vmem:[#allocation5 + $0xe0] sm:$0xff]
    %v87 = vld [vmem:[#allocation5 + $0xe8] sm:$0xff]
    %v88 = vld [vmem:[#allocation5 + $0xf0] sm:$0xff]
    %v89 = vld [vmem:[#allocation5 + $0xf8] sm:$0xff]
    %v90 = vld [vmem:[#allocation5 + $0x100] sm:$0xff]
    %v91 = vld [vmem:[#allocation5 + $0x108] sm:$0xff]
    %v92 = vld [vmem:[#allocation5 + $0x110] sm:$0xff]
    %v93 = vld [vmem:[#allocation5 + $0x118] sm:$0xff]
    %v94 = vld [vmem:[#allocation5 + $0x120] sm:$0xff]
    %v95 = vld [vmem:[#allocation5 + $0x128] sm:$0xff]
    %v96 = vld [vmem:[#allocation5 + $0x130] sm:$0xff]
    %v97 = vld [vmem:[#allocation5 + $0x138] sm:$0xff]
    %v98 = vld [vmem:[#allocation5 + $0x140] sm:$0xff]
    %v99 = vld [vmem:[#allocation5 + $0x148] sm:$0xff]
    %v100 = vld [vmem:[#allocation5 + $0x150] sm:$0xff]
    %v101 = vld [vmem:[#allocation5 + $0x158] sm:$0xff]
    %v102 = vld [vmem:[#allocation5 + $0x160] sm:$0xff]
    %v103 = vld [vmem:[#allocation5 + $0x168] sm:$0xff]
    %v104 = vld [vmem:[#allocation5 + $0x170] sm:$0xff]
    %v105 = vld [vmem:[#allocation5 + $0x178] sm:$0xff]
    %v106 = vld [vmem:[#allocation5 + $0x180] sm:$0xff]
    %v107 = vld [vmem:[#allocation5 + $0x188] sm:$0xff]
    %v108 = vld [vmem:[#allocation5 + $0x190] sm:$0xff]
    %v109 = vld [vmem:[#allocation5 + $0x198] sm:$0xff]
    %v110 = vld [vmem:[#allocation5 + $0x1a0] sm:$0xff]
    %v111 = vld [vmem:[#allocation5 + $0x1a8] sm:$0xff]
    %v112 = vld [vmem:[#allocation5 + $0x1b0] sm:$0xff]
    %v113 = vld [vmem:[#allocation5 + $0x1b8] sm:$0xff]
    %v114 = vld [vmem:[#allocation5 + $0x1c0] sm:$0xff]
    %v115 = vld [vmem:[#allocation5 + $0x1c8] sm:$0xff]
    %v116 = vld [vmem:[#allocation5 + $0x1d0] sm:$0xff]
    %v117 = vld [vmem:[#allocation5 + $0x1d8] sm:$0xff]
    %v118 = vld [vmem:[#allocation5 + $0x1e0] sm:$0xff]
    %v119 = vld [vmem:[#allocation5 + $0x1e8] sm:$0xff]
    %v120 = vld [vmem:[#allocation5 + $0x1f0] sm:$0xff]
    %v121 = vld [vmem:[#allocation5 + $0x1f8] sm:$0xff]
    %v122 = vld [vmem:[#allocation5 + $0x200] sm:$0xff]
    %v123 = vld [vmem:[#allocation5 + $0x208] sm:$0xff]
    %v124 = vld [vmem:[#allocation5 + $0x210] sm:$0xff]
    %v125 = vld [vmem:[#allocation5 + $0x218] sm:$0xff]
    %v126 = vld [vmem:[#allocation5 + $0x220] sm:$0xff]
    %v127 = vld [vmem:[#allocation5 + $0x228] sm:$0xff]
    %v128 = vld [vmem:[#allocation5 + $0x230] sm:$0xff]
    %v129 = vld [vmem:[#allocation5 + $0x238] sm:$0xff]
    %v130 = vld [vmem:[#allocation5 + $0x240] sm:$0xff]
    %v131 = vld [vmem:[#allocation5 + $0x248] sm:$0xff]
    %v132 = vld [vmem:[#allocation5 + $0x250] sm:$0xff]
    %v133 = vld [vmem:[#allocation5 + $0x258] sm:$0xff]
    %v134 = vld [vmem:[#allocation5 + $0x260] sm:$0xff]
    %v135 = vld [vmem:[#allocation5 + $0x268] sm:$0xff]
    %v136 = vld [vmem:[#allocation5 + $0x270] sm:$0xff]
    %v137 = vld [vmem:[#allocation5 + $0x278] sm:$0xff]
    %v138 = vld [vmem:[#allocation5 + $0x280] sm:$0xff]
    %v139 = vld [vmem:[#allocation5 + $0x288] sm:$0xff]
    %v140 = vld [vmem:[#allocation5 + $0x290] sm:$0xff]
    %v141 = vld [vmem:[#allocation5 + $0x298] sm:$0xff]
    %v142 = vld [vmem:[#allocation5 + $0x2a0] sm:$0xff]
    %v143 = vld [vmem:[#allocation5 + $0x2a8] sm:$0xff]
    %v144 = vld [vmem:[#allocation5 + $0x2b0] sm:$0xff]
    %v145 = vld [vmem:[#allocation5 + $0x2b8] sm:$0xff]
    %v146 = vld [vmem:[#allocation5 + $0x2c0] sm:$0xff]
    %v147 = vld [vmem:[#allocation5 + $0x2c8] sm:$0xff]
    %v148 = vld [vmem:[#allocation5 + $0x2d0] sm:$0xff]
    %v149 = vld [vmem:[#allocation5 + $0x2d8] sm:$0xff]
    %v150 = vld [vmem:[#allocation5 + $0x2e0] sm:$0xff]
    %v151 = vld [vmem:[#allocation5 + $0x2e8] sm:$0xff]
    %v152 = vld [vmem:[#allocation5 + $0x2f0] sm:$0xff]
    %v153 = vld [vmem:[#allocation5 + $0x2f8] sm:$0xff]
    %v154 = vld [vmem:[#allocation5 + $0x300] sm:$0xff]
    %v155 = vld [vmem:[#allocation5 + $0x308] sm:$0xff]
    %v156 = vld [vmem:[#allocation5 + $0x310] sm:$0xff]
    %v157 = vld [vmem:[#allocation5 + $0x318] sm:$0xff]
    %v158 = vld [vmem:[#allocation5 + $0x320] sm:$0xff]
    %v159 = vld [vmem:[#allocation5 + $0x328] sm:$0xff]
    %v160 = vld [vmem:[#allocation5 + $0x330] sm:$0xff]
    %v161 = vld [vmem:[#allocation5 + $0x338] sm:$0xff]
    %v162 = vld [vmem:[#allocation5 + $0x340] sm:$0xff]
    %v163 = vld [vmem:[#allocation5 + $0x348] sm:$0xff]
    %v164 = vld [vmem:[#allocation5 + $0x350] sm:$0xff]
    %v165 = vld [vmem:[#allocation5 + $0x358] sm:$0xff]
    %v166 = vld [vmem:[#allocation5 + $0x360] sm:$0xff]
    %v167 = vld [vmem:[#allocation5 + $0x368] sm:$0xff]
    %v168 = vld [vmem:[#allocation5 + $0x370] sm:$0xff]
    %v169 = vld [vmem:[#allocation5 + $0x378] sm:$0xff]
    %v170 = vld [vmem:[#allocation5 + $0x380] sm:$0xff]
    %v171 = vld [vmem:[#allocation5 + $0x388] sm:$0xff]
    %v172 = vld [vmem:[#allocation5 + $0x390] sm:$0xff]
    %v173 = vld [vmem:[#allocation5 + $0x398] sm:$0xff]
    %v174 = vld [vmem:[#allocation5 + $0x3a0] sm:$0xff]
    %v175 = vld [vmem:[#allocation5 + $0x3a8] sm:$0xff]
    %v176 = vld [vmem:[#allocation5 + $0x3b0] sm:$0xff]
    %v177 = vld [vmem:[#allocation5 + $0x3b8] sm:$0xff]
    %v178 = vld [vmem:[#allocation5 + $0x3c0] sm:$0xff]
    %v179 = vld [vmem:[#allocation5 + $0x3c8] sm:$0xff]
    %v180 = vld [vmem:[#allocation5 + $0x3d0] sm:$0xff]
    %v181 = vld [vmem:[#allocation5 + $0x3d8] sm:$0xff]
    %v182 = vld [vmem:[#allocation5 + $0x3e0] sm:$0xff]
    %v183 = vld [vmem:[#allocation5 + $0x3e8] sm:$0xff]
    %v184 = vld [vmem:[#allocation5 + $0x3f0] sm:$0xff]
    %v185 = vld [vmem:[#allocation5 + $0x3f8] sm:$0xff]
    %v186 = vld [vmem:[#allocation7] sm:$0xf]
    %v188 = vlaneseq
    %v189 = vshrl.u32 %v188, 7
    %v190 = vsub.s32 0, %v189
    %v191 = vrot.slane %v186, %v190
    %v192 = vlaneseq
    %v193 = vshrl.u32 %v192, 7
    %v194 = vsub.s32 1, %v193
    %v195 = vrot.slane %v186, %v194
    %v196 = vlaneseq
    %v197 = vshrl.u32 %v196, 7
    %v198 = vsub.s32 2, %v197
    %v199 = vrot.slane %v186, %v198
    %v200 = vlaneseq
    %v201 = vshrl.u32 %v200, 7
    %v202 = vsub.s32 3, %v201
    %v203 = vrot.slane %v186, %v202
    %v212 = vunpack.c.l.b16 %v54
    %v213 = vunpack.c.h.b16 %v54
    %v214 = vunpack.c.l.b16 %v55
    %v215 = vunpack.c.h.b16 %v55
    %v216 = vunpack.c.l.b16 %v56
    %v217 = vunpack.c.h.b16 %v56
    %v218 = vunpack.c.l.b16 %v57
    %v219 = vunpack.c.h.b16 %v57
    %v220 = vpack.c.b16 %v216, %v212
    %v221 = vpack.c.b16 %v217, %v213
    %v222 = vpack.c.b16 %v218, %v214
    %v223 = vpack.c.b16 %v219, %v215
    %v356 = vunpack.c.l.b16 %v58
    %v357 = vunpack.c.h.b16 %v58
    %v358 = vunpack.c.l.b16 %v59
    %v359 = vunpack.c.h.b16 %v59
    %v360 = vunpack.c.l.b16 %v60
    %v361 = vunpack.c.h.b16 %v60
    %v362 = vunpack.c.l.b16 %v61
    %v363 = vunpack.c.h.b16 %v61
    %v364 = vunpack.c.l.b16 %v62
    %v365 = vunpack.c.h.b16 %v62
    %v366 = vunpack.c.l.b16 %v63
    %v367 = vunpack.c.h.b16 %v63
    %v368 = vunpack.c.l.b16 %v64
    %v369 = vunpack.c.h.b16 %v64
    %v370 = vunpack.c.l.b16 %v65
    %v371 = vunpack.c.h.b16 %v65
    %v372 = vunpack.c.l.b16 %v66
    %v373 = vunpack.c.h.b16 %v66
    %v374 = vunpack.c.l.b16 %v67
    %v375 = vunpack.c.h.b16 %v67
    %v376 = vunpack.c.l.b16 %v68
    %v377 = vunpack.c.h.b16 %v68
    %v378 = vunpack.c.l.b16 %v69
    %v379 = vunpack.c.h.b16 %v69
    %v380 = vunpack.c.l.b16 %v70
    %v381 = vunpack.c.h.b16 %v70
    %v382 = vunpack.c.l.b16 %v71
    %v383 = vunpack.c.h.b16 %v71
    %v384 = vunpack.c.l.b16 %v72
    %v385 = vunpack.c.h.b16 %v72
    %v386 = vunpack.c.l.b16 %v73
    %v387 = vunpack.c.h.b16 %v73
    %v388 = vunpack.c.l.b16 %v74
    %v389 = vunpack.c.h.b16 %v74
    %v390 = vunpack.c.l.b16 %v75
    %v391 = vunpack.c.h.b16 %v75
    %v392 = vunpack.c.l.b16 %v76
    %v393 = vunpack.c.h.b16 %v76
    %v394 = vunpack.c.l.b16 %v77
    %v395 = vunpack.c.h.b16 %v77
    %v396 = vunpack.c.l.b16 %v78
    %v397 = vunpack.c.h.b16 %v78
    %v398 = vunpack.c.l.b16 %v79
    %v399 = vunpack.c.h.b16 %v79
    %v400 = vunpack.c.l.b16 %v80
    %v401 = vunpack.c.h.b16 %v80
    %v402 = vunpack.c.l.b16 %v81
    %v403 = vunpack.c.h.b16 %v81
    %v404 = vunpack.c.l.b16 %v82
    %v405 = vunpack.c.h.b16 %v82
    %v406 = vunpack.c.l.b16 %v83
    %v407 = vunpack.c.h.b16 %v83
    %v408 = vunpack.c.l.b16 %v84
    %v409 = vunpack.c.h.b16 %v84
    %v410 = vunpack.c.l.b16 %v85
    %v411 = vunpack.c.h.b16 %v85
    %v412 = vunpack.c.l.b16 %v86
    %v413 = vunpack.c.h.b16 %v86
    %v414 = vunpack.c.l.b16 %v87
    %v415 = vunpack.c.h.b16 %v87
    %v416 = vunpack.c.l.b16 %v88
    %v417 = vunpack.c.h.b16 %v88
    %v418 = vunpack.c.l.b16 %v89
    %v419 = vunpack.c.h.b16 %v89
    %v420 = vunpack.c.l.b16 %v90
    %v421 = vunpack.c.h.b16 %v90
    %v422 = vunpack.c.l.b16 %v91
    %v423 = vunpack.c.h.b16 %v91
    %v424 = vunpack.c.l.b16 %v92
    %v425 = vunpack.c.h.b16 %v92
    %v426 = vunpack.c.l.b16 %v93
    %v427 = vunpack.c.h.b16 %v93
    %v428 = vunpack.c.l.b16 %v94
    %v429 = vunpack.c.h.b16 %v94
    %v430 = vunpack.c.l.b16 %v95
    %v431 = vunpack.c.h.b16 %v95
    %v432 = vunpack.c.l.b16 %v96
    %v433 = vunpack.c.h.b16 %v96
    %v434 = vunpack.c.l.b16 %v97
    %v435 = vunpack.c.h.b16 %v97
    %v436 = vunpack.c.l.b16 %v98
    %v437 = vunpack.c.h.b16 %v98
    %v438 = vunpack.c.l.b16 %v99
    %v439 = vunpack.c.h.b16 %v99
    %v440 = vunpack.c.l.b16 %v100
    %v441 = vunpack.c.h.b16 %v100
    %v442 = vunpack.c.l.b16 %v101
    %v443 = vunpack.c.h.b16 %v101
    %v444 = vunpack.c.l.b16 %v102
    %v445 = vunpack.c.h.b16 %v102
    %v446 = vunpack.c.l.b16 %v103
    %v447 = vunpack.c.h.b16 %v103
    %v448 = vunpack.c.l.b16 %v104
    %v449 = vunpack.c.h.b16 %v104
    %v450 = vunpack.c.l.b16 %v105
    %v451 = vunpack.c.h.b16 %v105
    %v452 = vunpack.c.l.b16 %v106
    %v453 = vunpack.c.h.b16 %v106
    %v454 = vunpack.c.l.b16 %v107
    %v455 = vunpack.c.h.b16 %v107
    %v456 = vunpack.c.l.b16 %v108
    %v457 = vunpack.c.h.b16 %v108
    %v458 = vunpack.c.l.b16 %v109
    %v459 = vunpack.c.h.b16 %v109
    %v460 = vunpack.c.l.b16 %v110
    %v461 = vunpack.c.h.b16 %v110
    %v462 = vunpack.c.l.b16 %v111
    %v463 = vunpack.c.h.b16 %v111
    %v464 = vunpack.c.l.b16 %v112
    %v465 = vunpack.c.h.b16 %v112
    %v466 = vunpack.c.l.b16 %v113
    %v467 = vunpack.c.h.b16 %v113
    %v468 = vunpack.c.l.b16 %v114
    %v469 = vunpack.c.h.b16 %v114
    %v470 = vunpack.c.l.b16 %v115
    %v471 = vunpack.c.h.b16 %v115
    %v472 = vunpack.c.l.b16 %v116
    %v473 = vunpack.c.h.b16 %v116
    %v474 = vunpack.c.l.b16 %v117
    %v475 = vunpack.c.h.b16 %v117
    %v476 = vunpack.c.l.b16 %v118
    %v477 = vunpack.c.h.b16 %v118
    %v478 = vunpack.c.l.b16 %v119
    %v479 = vunpack.c.h.b16 %v119
    %v480 = vunpack.c.l.b16 %v120
    %v481 = vunpack.c.h.b16 %v120
    %v482 = vunpack.c.l.b16 %v121
    %v483 = vunpack.c.h.b16 %v121
    %v484 = vunpack.c.l.b16 %v122
    %v485 = vunpack.c.h.b16 %v122
    %v486 = vunpack.c.l.b16 %v123
    %v487 = vunpack.c.h.b16 %v123
    %v488 = vunpack.c.l.b16 %v124
    %v489 = vunpack.c.h.b16 %v124
    %v490 = vunpack.c.l.b16 %v125
    %v491 = vunpack.c.h.b16 %v125
    %v492 = vunpack.c.l.b16 %v126
    %v493 = vunpack.c.h.b16 %v126
    %v494 = vunpack.c.l.b16 %v127
    %v495 = vunpack.c.h.b16 %v127
    %v496 = vunpack.c.l.b16 %v128
    %v497 = vunpack.c.h.b16 %v128
    %v498 = vunpack.c.l.b16 %v129
    %v499 = vunpack.c.h.b16 %v129
    %v500 = vunpack.c.l.b16 %v130
    %v501 = vunpack.c.h.b16 %v130
    %v502 = vunpack.c.l.b16 %v131
    %v503 = vunpack.c.h.b16 %v131
    %v504 = vunpack.c.l.b16 %v132
    %v505 = vunpack.c.h.b16 %v132
    %v506 = vunpack.c.l.b16 %v133
    %v507 = vunpack.c.h.b16 %v133
    %v508 = vunpack.c.l.b16 %v134
    %v509 = vunpack.c.h.b16 %v134
    %v510 = vunpack.c.l.b16 %v135
    %v511 = vunpack.c.h.b16 %v135
    %v512 = vunpack.c.l.b16 %v136
    %v513 = vunpack.c.h.b16 %v136
    %v514 = vunpack.c.l.b16 %v137
    %v515 = vunpack.c.h.b16 %v137
    %v516 = vunpack.c.l.b16 %v138
    %v517 = vunpack.c.h.b16 %v138
    %v518 = vunpack.c.l.b16 %v139
    %v519 = vunpack.c.h.b16 %v139
    %v520 = vunpack.c.l.b16 %v140
    %v521 = vunpack.c.h.b16 %v140
    %v522 = vunpack.c.l.b16 %v141
    %v523 = vunpack.c.h.b16 %v141
    %v524 = vunpack.c.l.b16 %v142
    %v525 = vunpack.c.h.b16 %v142
    %v526 = vunpack.c.l.b16 %v143
    %v527 = vunpack.c.h.b16 %v143
    %v528 = vunpack.c.l.b16 %v144
    %v529 = vunpack.c.h.b16 %v144
    %v530 = vunpack.c.l.b16 %v145
    %v531 = vunpack.c.h.b16 %v145
    %v532 = vunpack.c.l.b16 %v146
    %v533 = vunpack.c.h.b16 %v146
    %v534 = vunpack.c.l.b16 %v147
    %v535 = vunpack.c.h.b16 %v147
    %v536 = vunpack.c.l.b16 %v148
    %v537 = vunpack.c.h.b16 %v148
    %v538 = vunpack.c.l.b16 %v149
    %v539 = vunpack.c.h.b16 %v149
    %v540 = vunpack.c.l.b16 %v150
    %v541 = vunpack.c.h.b16 %v150
    %v542 = vunpack.c.l.b16 %v151
    %v543 = vunpack.c.h.b16 %v151
    %v544 = vunpack.c.l.b16 %v152
    %v545 = vunpack.c.h.b16 %v152
    %v546 = vunpack.c.l.b16 %v153
    %v547 = vunpack.c.h.b16 %v153
    %v548 = vunpack.c.l.b16 %v154
    %v549 = vunpack.c.h.b16 %v154
    %v550 = vunpack.c.l.b16 %v155
    %v551 = vunpack.c.h.b16 %v155
    %v552 = vunpack.c.l.b16 %v156
    %v553 = vunpack.c.h.b16 %v156
    %v554 = vunpack.c.l.b16 %v157
    %v555 = vunpack.c.h.b16 %v157
    %v556 = vunpack.c.l.b16 %v158
    %v557 = vunpack.c.h.b16 %v158
    %v558 = vunpack.c.l.b16 %v159
    %v559 = vunpack.c.h.b16 %v159
    %v560 = vunpack.c.l.b16 %v160
    %v561 = vunpack.c.h.b16 %v160
    %v562 = vunpack.c.l.b16 %v161
    %v563 = vunpack.c.h.b16 %v161
    %v564 = vunpack.c.l.b16 %v162
    %v565 = vunpack.c.h.b16 %v162
    %v566 = vunpack.c.l.b16 %v163
    %v567 = vunpack.c.h.b16 %v163
    %v568 = vunpack.c.l.b16 %v164
    %v569 = vunpack.c.h.b16 %v164
    %v570 = vunpack.c.l.b16 %v165
    %v571 = vunpack.c.h.b16 %v165
    %v572 = vunpack.c.l.b16 %v166
    %v573 = vunpack.c.h.b16 %v166
    %v574 = vunpack.c.l.b16 %v167
    %v575 = vunpack.c.h.b16 %v167
    %v576 = vunpack.c.l.b16 %v168
    %v577 = vunpack.c.h.b16 %v168
    %v578 = vunpack.c.l.b16 %v169
    %v579 = vunpack.c.h.b16 %v169
    %v580 = vunpack.c.l.b16 %v170
    %v581 = vunpack.c.h.b16 %v170
    %v582 = vunpack.c.l.b16 %v171
    %v583 = vunpack.c.h.b16 %v171
    %v584 = vunpack.c.l.b16 %v172
    %v585 = vunpack.c.h.b16 %v172
    %v586 = vunpack.c.l.b16 %v173
    %v587 = vunpack.c.h.b16 %v173
    %v588 = vunpack.c.l.b16 %v174
    %v589 = vunpack.c.h.b16 %v174
    %v590 = vunpack.c.l.b16 %v175
    %v591 = vunpack.c.h.b16 %v175
    %v592 = vunpack.c.l.b16 %v176
    %v593 = vunpack.c.h.b16 %v176
    %v594 = vunpack.c.l.b16 %v177
    %v595 = vunpack.c.h.b16 %v177
    %v596 = vunpack.c.l.b16 %v178
    %v597 = vunpack.c.h.b16 %v178
    %v598 = vunpack.c.l.b16 %v179
    %v599 = vunpack.c.h.b16 %v179
    %v600 = vunpack.c.l.b16 %v180
    %v601 = vunpack.c.h.b16 %v180
    %v602 = vunpack.c.l.b16 %v181
    %v603 = vunpack.c.h.b16 %v181
    %v604 = vunpack.c.l.b16 %v182
    %v605 = vunpack.c.h.b16 %v182
    %v606 = vunpack.c.l.b16 %v183
    %v607 = vunpack.c.h.b16 %v183
    %v608 = vunpack.c.l.b16 %v184
    %v609 = vunpack.c.h.b16 %v184
    %v610 = vunpack.c.l.b16 %v185
    %v611 = vunpack.c.h.b16 %v185
    %v612 = vpack.c.b16 %v360, %v356
    %v613 = vpack.c.b16 %v361, %v357
    %v614 = vpack.c.b16 %v362, %v358
    %v615 = vpack.c.b16 %v363, %v359
    %v616 = vpack.c.b16 %v368, %v364
    %v617 = vpack.c.b16 %v369, %v365
    %v618 = vpack.c.b16 %v370, %v366
    %v619 = vpack.c.b16 %v371, %v367
    %v620 = vpack.c.b16 %v376, %v372
    %v621 = vpack.c.b16 %v377, %v373
    %v622 = vpack.c.b16 %v378, %v374
    %v623 = vpack.c.b16 %v379, %v375
    %v624 = vpack.c.b16 %v384, %v380
    %v625 = vpack.c.b16 %v385, %v381
    %v626 = vpack.c.b16 %v386, %v382
    %v627 = vpack.c.b16 %v387, %v383
    %v628 = vpack.c.b16 %v392, %v388
    %v629 = vpack.c.b16 %v393, %v389
    %v630 = vpack.c.b16 %v394, %v390
    %v631 = vpack.c.b16 %v395, %v391
    %v632 = vpack.c.b16 %v400, %v396
    %v633 = vpack.c.b16 %v401, %v397
    %v634 = vpack.c.b16 %v402, %v398
    %v635 = vpack.c.b16 %v403, %v399
    %v636 = vpack.c.b16 %v408, %v404
    %v637 = vpack.c.b16 %v409, %v405
    %v638 = vpack.c.b16 %v410, %v406
    %v639 = vpack.c.b16 %v411, %v407
    %v640 = vpack.c.b16 %v416, %v412
    %v641 = vpack.c.b16 %v417, %v413
    %v642 = vpack.c.b16 %v418, %v414
    %v643 = vpack.c.b16 %v419, %v415
    %v644 = vpack.c.b16 %v424, %v420
    %v645 = vpack.c.b16 %v425, %v421
    %v646 = vpack.c.b16 %v426, %v422
    %v647 = vpack.c.b16 %v427, %v423
    %v648 = vpack.c.b16 %v432, %v428
    %v649 = vpack.c.b16 %v433, %v429
    %v650 = vpack.c.b16 %v434, %v430
    %v651 = vpack.c.b16 %v435, %v431
    %v652 = vpack.c.b16 %v440, %v436
    %v653 = vpack.c.b16 %v441, %v437
    %v654 = vpack.c.b16 %v442, %v438
    %v655 = vpack.c.b16 %v443, %v439
    %v656 = vpack.c.b16 %v448, %v444
    %v657 = vpack.c.b16 %v449, %v445
    %v658 = vpack.c.b16 %v450, %v446
    %v659 = vpack.c.b16 %v451, %v447
    %v660 = vpack.c.b16 %v456, %v452
    %v661 = vpack.c.b16 %v457, %v453
    %v662 = vpack.c.b16 %v458, %v454
    %v663 = vpack.c.b16 %v459, %v455
    %v664 = vpack.c.b16 %v464, %v460
    %v665 = vpack.c.b16 %v465, %v461
    %v666 = vpack.c.b16 %v466, %v462
    %v667 = vpack.c.b16 %v467, %v463
    %v668 = vpack.c.b16 %v472, %v468
    %v669 = vpack.c.b16 %v473, %v469
    %v670 = vpack.c.b16 %v474, %v470
    %v671 = vpack.c.b16 %v475, %v471
    %v672 = vpack.c.b16 %v480, %v476
    %v673 = vpack.c.b16 %v481, %v477
    %v674 = vpack.c.b16 %v482, %v478
    %v675 = vpack.c.b16 %v483, %v479
    %v676 = vpack.c.b16 %v488, %v484
    %v677 = vpack.c.b16 %v489, %v485
    %v678 = vpack.c.b16 %v490, %v486
    %v679 = vpack.c.b16 %v491, %v487
    %v680 = vpack.c.b16 %v496, %v492
    %v681 = vpack.c.b16 %v497, %v493
    %v682 = vpack.c.b16 %v498, %v494
    %v683 = vpack.c.b16 %v499, %v495
    %v684 = vpack.c.b16 %v504, %v500
    %v685 = vpack.c.b16 %v505, %v501
    %v686 = vpack.c.b16 %v506, %v502
    %v687 = vpack.c.b16 %v507, %v503
    %v688 = vpack.c.b16 %v512, %v508
    %v689 = vpack.c.b16 %v513, %v509
    %v690 = vpack.c.b16 %v514, %v510
    %v691 = vpack.c.b16 %v515, %v511
    %v692 = vpack.c.b16 %v520, %v516
    %v693 = vpack.c.b16 %v521, %v517
    %v694 = vpack.c.b16 %v522, %v518
    %v695 = vpack.c.b16 %v523, %v519
    %v696 = vpack.c.b16 %v528, %v524
    %v697 = vpack.c.b16 %v529, %v525
    %v698 = vpack.c.b16 %v530, %v526
    %v699 = vpack.c.b16 %v531, %v527
    %v700 = vpack.c.b16 %v536, %v532
    %v701 = vpack.c.b16 %v537, %v533
    %v702 = vpack.c.b16 %v538, %v534
    %v703 = vpack.c.b16 %v539, %v535
    %v704 = vpack.c.b16 %v544, %v540
    %v705 = vpack.c.b16 %v545, %v541
    %v706 = vpack.c.b16 %v546, %v542
    %v707 = vpack.c.b16 %v547, %v543
    %v708 = vpack.c.b16 %v552, %v548
    %v709 = vpack.c.b16 %v553, %v549
    %v710 = vpack.c.b16 %v554, %v550
    %v711 = vpack.c.b16 %v555, %v551
    %v712 = vpack.c.b16 %v560, %v556
    %v713 = vpack.c.b16 %v561, %v557
    %v714 = vpack.c.b16 %v562, %v558
    %v715 = vpack.c.b16 %v563, %v559
    %v716 = vpack.c.b16 %v568, %v564
    %v717 = vpack.c.b16 %v569, %v565
    %v718 = vpack.c.b16 %v570, %v566
    %v719 = vpack.c.b16 %v571, %v567
    %v720 = vpack.c.b16 %v576, %v572
    %v721 = vpack.c.b16 %v577, %v573
    %v722 = vpack.c.b16 %v578, %v574
    %v723 = vpack.c.b16 %v579, %v575
    %v724 = vpack.c.b16 %v584, %v580
    %v725 = vpack.c.b16 %v585, %v581
    %v726 = vpack.c.b16 %v586, %v582
    %v727 = vpack.c.b16 %v587, %v583
    %v728 = vpack.c.b16 %v592, %v588
    %v729 = vpack.c.b16 %v593, %v589
    %v730 = vpack.c.b16 %v594, %v590
    %v731 = vpack.c.b16 %v595, %v591
    %v732 = vpack.c.b16 %v600, %v596
    %v733 = vpack.c.b16 %v601, %v597
    %v734 = vpack.c.b16 %v602, %v598
    %v735 = vpack.c.b16 %v603, %v599
    %v736 = vpack.c.b16 %v608, %v604
    %v737 = vpack.c.b16 %v609, %v605
    %v738 = vpack.c.b16 %v610, %v606
    %v739 = vpack.c.b16 %v611, %v607
    %868 = vmatprep.subr.bf16.mxu0 %v641
    %869 = vmatpush1.bf16.msra.mxu0 %v640
    %870 = vmatprep.subr.bf16.mxu0 %v637
    %871 = vmatpush1.bf16.msra.mxu0 %v636
    %872 = vmatprep.subr.bf16.mxu0 %v633
    %873 = vmatpush1.bf16.msra.mxu0 %v632
    %874 = vmatprep.subr.bf16.mxu0 %v629
    %875 = vmatpush1.bf16.msra.mxu0 %v628
    %876 = vmatprep.subr.bf16.mxu0 %v625
    %877 = vmatpush1.bf16.msra.mxu0 %v624
    %878 = vmatprep.subr.bf16.mxu0 %v621
    %879 = vmatpush1.bf16.msra.mxu0 %v620
    %880 = vmatprep.subr.bf16.mxu0 %v617
    %881 = vmatpush1.bf16.msra.mxu0 %v616
    %882 = vmatprep.subr.bf16.mxu0 %v613
    %883 = vmatpush1.bf16.msra.mxu0 %v612
    %884 = vmatprep.subr.bf16.mxu0 %v673
    %885 = vmatpush2.bf16.msra.mxu0 %v672
    %886 = vmatprep.subr.bf16.mxu0 %v669
    %887 = vmatpush2.bf16.msra.mxu0 %v668
    %888 = vmatprep.subr.bf16.mxu0 %v665
    %889 = vmatpush2.bf16.msra.mxu0 %v664
    %890 = vmatprep.subr.bf16.mxu0 %v661
    %891 = vmatpush2.bf16.msra.mxu0 %v660
    %892 = vmatprep.subr.bf16.mxu0 %v657
    %893 = vmatpush2.bf16.msra.mxu0 %v656
    %894 = vmatprep.subr.bf16.mxu0 %v653
    %895 = vmatpush2.bf16.msra.mxu0 %v652
    %896 = vmatprep.subr.bf16.mxu0 %v649
    %897 = vmatpush2.bf16.msra.mxu0 %v648
    %898 = vmatprep.subr.bf16.mxu0 %v645
    %899 = vmatpush2.bf16.msra.mxu0 %v644
    %900 = vmatprep.mubr.bf16.mxu0 %v221
    %901 = vmatmul.mubr.bf16.gmra.mxu0 %v220
    %v902 = vpop.f32.mrf.mxu0
    %v903 = vadd.f32 %v191, %v902
    %v904 = vpop.f32.mrf.mxu0
    %v905 = vadd.f32 %v195, %v904
    %v906 = vpop.f32.mrf.mxu0
    %v907 = vadd.f32 %v191, %v906
    %v908 = vpop.f32.mrf.mxu0
    %v909 = vadd.f32 %v195, %v908
    %910 = vdwg.mxu0
    %911 = vmatprep.subr.bf16.mxu0 %v705
    %912 = vmatpush1.bf16.msra.mxu0 %v704
    %913 = vmatprep.subr.bf16.mxu0 %v701
    %914 = vmatpush1.bf16.msra.mxu0 %v700
    %915 = vmatprep.subr.bf16.mxu0 %v697
    %916 = vmatpush1.bf16.msra.mxu0 %v696
    %917 = vmatprep.subr.bf16.mxu0 %v693
    %918 = vmatpush1.bf16.msra.mxu0 %v692
    %919 = vmatprep.subr.bf16.mxu0 %v689
    %920 = vmatpush1.bf16.msra.mxu0 %v688
    %921 = vmatprep.subr.bf16.mxu0 %v685
    %922 = vmatpush1.bf16.msra.mxu0 %v684
    %923 = vmatprep.subr.bf16.mxu0 %v681
    %924 = vmatpush1.bf16.msra.mxu0 %v680
    %925 = vmatprep.subr.bf16.mxu0 %v677
    %926 = vmatpush1.bf16.msra.mxu0 %v676
    %927 = vmatprep.subr.bf16.mxu0 %v737
    %928 = vmatpush2.bf16.msra.mxu0 %v736
    %929 = vmatprep.subr.bf16.mxu0 %v733
    %930 = vmatpush2.bf16.msra.mxu0 %v732
    %931 = vmatprep.subr.bf16.mxu0 %v729
    %932 = vmatpush2.bf16.msra.mxu0 %v728
    %933 = vmatprep.subr.bf16.mxu0 %v725
    %934 = vmatpush2.bf16.msra.mxu0 %v724
    %935 = vmatprep.subr.bf16.mxu0 %v721
    %936 = vmatpush2.bf16.msra.mxu0 %v720
    %937 = vmatprep.subr.bf16.mxu0 %v717
    %938 = vmatpush2.bf16.msra.mxu0 %v716
    %939 = vmatprep.subr.bf16.mxu0 %v713
    %940 = vmatpush2.bf16.msra.mxu0 %v712
    %941 = vmatprep.subr.bf16.mxu0 %v709
    %942 = vmatpush2.bf16.msra.mxu0 %v708
    %943 = vmatprep.mubr.bf16.mxu0 %v223
    %944 = vmatmul.mubr.bf16.gmra.mxu0 %v222
    %v945 = vpop.f32.mrf.mxu0
    %v946 = vadd.f32 %v903, %v945
    %v947 = vpop.f32.mrf.mxu0
    %v948 = vadd.f32 %v905, %v947
    %v949 = vpop.f32.mrf.mxu0
    %v950 = vadd.f32 %v907, %v949
    %v951 = vpop.f32.mrf.mxu0
    %v952 = vadd.f32 %v909, %v951
    %953 = vdwg.mxu0
    %954 = vmatprep.subr.bf16.mxu0 %v643
    %955 = vmatpush1.bf16.msra.mxu0 %v642
    %956 = vmatprep.subr.bf16.mxu0 %v639
    %957 = vmatpush1.bf16.msra.mxu0 %v638
    %958 = vmatprep.subr.bf16.mxu0 %v635
    %959 = vmatpush1.bf16.msra.mxu0 %v634
    %960 = vmatprep.subr.bf16.mxu0 %v631
    %961 = vmatpush1.bf16.msra.mxu0 %v630
    %962 = vmatprep.subr.bf16.mxu0 %v627
    %963 = vmatpush1.bf16.msra.mxu0 %v626
    %964 = vmatprep.subr.bf16.mxu0 %v623
    %965 = vmatpush1.bf16.msra.mxu0 %v622
    %966 = vmatprep.subr.bf16.mxu0 %v619
    %967 = vmatpush1.bf16.msra.mxu0 %v618
    %968 = vmatprep.subr.bf16.mxu0 %v615
    %969 = vmatpush1.bf16.msra.mxu0 %v614
    %970 = vmatprep.subr.bf16.mxu0 %v675
    %971 = vmatpush2.bf16.msra.mxu0 %v674
    %972 = vmatprep.subr.bf16.mxu0 %v671
    %973 = vmatpush2.bf16.msra.mxu0 %v670
    %974 = vmatprep.subr.bf16.mxu0 %v667
    %975 = vmatpush2.bf16.msra.mxu0 %v666
    %976 = vmatprep.subr.bf16.mxu0 %v663
    %977 = vmatpush2.bf16.msra.mxu0 %v662
    %978 = vmatprep.subr.bf16.mxu0 %v659
    %979 = vmatpush2.bf16.msra.mxu0 %v658
    %980 = vmatprep.subr.bf16.mxu0 %v655
    %981 = vmatpush2.bf16.msra.mxu0 %v654
    %982 = vmatprep.subr.bf16.mxu0 %v651
    %983 = vmatpush2.bf16.msra.mxu0 %v650
    %984 = vmatprep.subr.bf16.mxu0 %v647
    %985 = vmatpush2.bf16.msra.mxu0 %v646
    %986 = vmatprep.mubr.bf16.mxu0 %v221
    %987 = vmatmul.mubr.bf16.gmra.mxu0 %v220
    %v988 = vpop.f32.mrf.mxu0
    %v989 = vadd.f32 %v199, %v988
    %v990 = vpop.f32.mrf.mxu0
    %v991 = vadd.f32 %v203, %v990
    %v992 = vpop.f32.mrf.mxu0
    %v993 = vadd.f32 %v199, %v992
    %v994 = vpop.f32.mrf.mxu0
    %v995 = vadd.f32 %v203, %v994
    %996 = vdwg.mxu0
    %997 = vmatprep.subr.bf16.mxu0 %v707
    %998 = vmatpush1.bf16.msra.mxu0 %v706
    %999 = vmatprep.subr.bf16.mxu0 %v703
    %1000 = vmatpush1.bf16.msra.mxu0 %v702
    %1001 = vmatprep.subr.bf16.mxu0 %v699
    %1002 = vmatpush1.bf16.msra.mxu0 %v698
    %1003 = vmatprep.subr.bf16.mxu0 %v695
    %1004 = vmatpush1.bf16.msra.mxu0 %v694
    %1005 = vmatprep.subr.bf16.mxu0 %v691
    %1006 = vmatpush1.bf16.msra.mxu0 %v690
    %1007 = vmatprep.subr.bf16.mxu0 %v687
    %1008 = vmatpush1.bf16.msra.mxu0 %v686
    %1009 = vmatprep.subr.bf16.mxu0 %v683
    %1010 = vmatpush1.bf16.msra.mxu0 %v682
    %1011 = vmatprep.subr.bf16.mxu0 %v679
    %1012 = vmatpush1.bf16.msra.mxu0 %v678
    %1013 = vmatprep.subr.bf16.mxu0 %v739
    %1014 = vmatpush2.bf16.msra.mxu0 %v738
    %1015 = vmatprep.subr.bf16.mxu0 %v735
    %1016 = vmatpush2.bf16.msra.mxu0 %v734
    %1017 = vmatprep.subr.bf16.mxu0 %v731
    %1018 = vmatpush2.bf16.msra.mxu0 %v730
    %1019 = vmatprep.subr.bf16.mxu0 %v727
    %1020 = vmatpush2.bf16.msra.mxu0 %v726
    %1021 = vmatprep.subr.bf16.mxu0 %v723
    %1022 = vmatpush2.bf16.msra.mxu0 %v722
    %1023 = vmatprep.subr.bf16.mxu0 %v719
    %1024 = vmatpush2.bf16.msra.mxu0 %v718
    %1025 = vmatprep.subr.bf16.mxu0 %v715
    %1026 = vmatpush2.bf16.msra.mxu0 %v714
    %1027 = vmatprep.subr.bf16.mxu0 %v711
    %1028 = vmatpush2.bf16.msra.mxu0 %v710
    %1029 = vmatprep.mubr.bf16.mxu0 %v223
    %1030 = vmatmul.mubr.bf16.gmra.mxu0 %v222
    %v1031 = vpop.f32.mrf.mxu0
    %v1032 = vadd.f32 %v989, %v1031
    %v1033 = vpop.f32.mrf.mxu0
    %v1034 = vadd.f32 %v991, %v1033
    %v1035 = vpop.f32.mrf.mxu0
    %v1036 = vadd.f32 %v993, %v1035
    %v1037 = vpop.f32.mrf.mxu0
    %v1038 = vadd.f32 %v995, %v1037
    %1039 = vdwg.mxu0
    %1040 = vst [vmem:[#allocation8] sm:$0xff] %v946
    %1041 = vst [vmem:[#allocation8 + $0x8] sm:$0xff] %v948
    %1042 = vst [vmem:[#allocation8 + $0x10] sm:$0xff] %v1032
    %1043 = vst [vmem:[#allocation8 + $0x18] sm:$0xff] %v1034
    %1044 = vst [vmem:[#allocation8 + $0x20] sm:$0xff] %v950
    %1045 = vst [vmem:[#allocation8 + $0x28] sm:$0xff] %v952
    %1046 = vst [vmem:[#allocation8 + $0x30] sm:$0xff] %v1036
    %1047 = vst [vmem:[#allocation8 + $0x38] sm:$0xff] %v1038
    // Predicated region
    $region26: #{tpu_custom_call.1} parent=1 // pred_check
      _
    $region27: #{tpu_custom_call.1} parent=1 // pred_check_branch
      %1049 = sbr.rel (0) target = $region29
    $region28: #{tpu_custom_call.1} parent=1 // pred_region
      %s1051 = ssub.s32 1024, 1024
      %1052 = vsyncadd [#allocation4], %s1051
      %s1053 = sshll.u32 [#allocation8], 4
      %s1054 = int_to_ptr.vmem [resolvable:$true] %s1053
      %1059 = dma.vmem_to_hbm [thread:$0]  %s1054, 1024, %s3, [#allocation4], 512, 512, 32
    $region29: #{tpu_custom_call.1} parent=1 // pred_fallthru
      _
    // Predicated region
    $region30: #{tpu_custom_call.1} parent=1 // pred_check
      _
    $region31: #{tpu_custom_call.1} parent=1 // pred_check_branch
      %1061 = sbr.rel (0) target = $region33
    $region32: #{tpu_custom_call.1} parent=1 // pred_region
      %1062 = dma.done [#allocation4], 1024
    $region33: #{tpu_custom_call.1} parent=1 // pred_fallthru
      _
    %1063 = vsyncpa [#allocation3], 1
    %1064 = vsyncpa [#allocation6], 1
    %1065 = vsyncpa [#allocation4], 1

</llo_original>
